<compile_context>
chip_gen: v7x
topology: tpu7x:2x2x1
jax: 0.10.0
libtpu: 0.0.40
codegen_flags: <defaults>
</compile_context>

<pallas_src>
import jax
import jax.numpy as jnp
from jax.experimental import pallas as pl
from jax.experimental.pallas import tpu as pltpu


def _round_up(v, m):
    return ((v + m - 1) // m) * m


def _linear_softmax_parts(x_ref, wt_ref, b_ref):
    # x: [TB, Din], wt: [Din, Dout] (pre-transposed in wrapper), b: [1, Dout]
    raw = jnp.dot(x_ref[...], wt_ref[...], preferred_element_type=jnp.float32) + b_ref[...]
    m = jnp.max(raw, axis=-1, keepdims=True)
    shifted = raw - m
    e = jnp.exp(shifted)
    denom = jnp.sum(e, axis=-1, keepdims=True)
    return shifted, e, denom


def _logits_kernel(x_ref, wt_ref, b_ref, logits_ref):
    shifted, _e, denom = _linear_softmax_parts(x_ref, wt_ref, b_ref)
    logits_ref[...] = (shifted - jnp.log(denom)).astype(logits_ref.dtype)


def _logits_probs_kernel(x_ref, wt_ref, b_ref, logits_ref, probs_ref):
    shifted, e, denom = _linear_softmax_parts(x_ref, wt_ref, b_ref)
    logits_ref[...] = (shifted - jnp.log(denom)).astype(logits_ref.dtype)
    # Exact reciprocal on the [TB, 1] column (VALU divide on one lane per row) so rows sum to 1
    # to f32 precision; the approximate EUP vrcp was too coarse for downstream sum/KL checks.
    probs_ref[...] = (e * (1.0 / denom)).astype(probs_ref.dtype)


def categorical_forward(x, weight, bias, *, block_b=8192, return_probs=False,
                        out_dtype=jnp.float32):
    """State of FixedCategorical(logits = x @ W.T + b).

    Returns normalized logits, and (optionally) probs.
      x:      [B, num_inputs]
      weight: [num_outputs, num_inputs]   (PyTorch nn.Linear layout)
      bias:   [num_outputs]
    """
    B, Din = x.shape
    Dout, Din_w = weight.shape
    assert Din == Din_w and bias.shape == (Dout,)

    # One-time layout plumbing outside the hot loop.
    wt = weight.T                      # [Din, Dout] feeds the MXU directly
    bias2d = bias.reshape(1, Dout)

    n_out = 2 if return_probs else 1
    out_itemsize = jnp.dtype(out_dtype).itemsize

    # --- Batch tile selection -------------------------------------------------
    # Big enough to amortize ~0.35 us/grid-step overhead, small enough to keep >= 4 grid steps
    # at production B (pipelining + v7x megacore), always a multiple of 8.
    tb = min(block_b, _round_up(pl.cdiv(B, 4), 8))
    # Cap so double-buffered x + output tiles stay well under v7x's 64 MiB physical VMEM.
    row_bytes = x.dtype.itemsize * Din + n_out * out_itemsize * Dout
    max_tb = max(8, ((40 << 20) // (2 * row_bytes)) // 8 * 8)
    tb = max(8, min(tb, max_tb))
    nb = pl.cdiv(B, tb)  # ragged last block: padded reads, masked stores (no pad / slice passes)

    # Explicit scoped-VMEM limit sized to what this kernel actually uses (portable across gens).
    step_bytes = tb * row_bytes
    vmem_needed = 2 * step_bytes + (Din * Dout + Dout) * 4 + (1 << 20)
    vmem_limit = int(min(max(vmem_needed, 16 << 20), 48 << 20))

    in_specs = [
        pl.BlockSpec((tb, Din), lambda i: (i, 0)),     # x: tiled over batch (pipelined)
        pl.BlockSpec((Din, Dout), lambda i: (0, 0)),   # W^T: VMEM-resident across steps
        pl.BlockSpec((1, Dout), lambda i: (0, 0)),     # bias: VMEM-resident across steps
    ]

    if return_probs:
        kernel = _logits_probs_kernel
        out_shape = (jax.ShapeDtypeStruct((B, Dout), out_dtype),
                     jax.ShapeDtypeStruct((B, Dout), out_dtype))
        out_specs = (pl.BlockSpec((tb, Dout), lambda i: (i, 0)),
                     pl.BlockSpec((tb, Dout), lambda i: (i, 0)))
    else:
        kernel = _logits_kernel
        out_shape = jax.ShapeDtypeStruct((B, Dout), out_dtype)
        out_specs = pl.BlockSpec((tb, Dout), lambda i: (i, 0))

    return pl.pallas_call(
        kernel,
        out_shape=out_shape,
        grid=(nb,),
        in_specs=in_specs,
        out_specs=out_specs,
        compiler_params=pltpu.CompilerParams(
            dimension_semantics=("parallel",),   # independent batch tiles -> megacore on v7x
            vmem_limit_bytes=vmem_limit,
        ),
    )(x, wt, bias2d)


def orthogonal_init(key, rows, cols, gain=0.01, dtype=jnp.float32):
    """Deterministic equivalent of nn.init.orthogonal_ with gain (weight shape [rows, cols])."""
    transposed = rows < cols
    a = jax.random.normal(key, (max(rows, cols), min(rows, cols)), dtype=jnp.float32)
    q, r = jnp.linalg.qr(a)
    d = jnp.sign(jnp.diagonal(r))      # sign correction so Q is uniform, as torch does
    q = q * d[None, :]
    if transposed:
        q = q.T
    return (gain * q[:rows, :cols]).astype(dtype)


if __name__ == "__main__":
    num_inputs, num_outputs = 32, 16

    key = jax.random.PRNGKey(0)
    kx, kw, kx2 = jax.random.split(key, 3)

    # Deterministic parameter init matching __init__ (zero_init=False):
    #   weight ~ orthogonal_(gain=0.01), bias = 0
    weight = orthogonal_init(kw, num_outputs, num_inputs, gain=0.01)
    bias = jnp.zeros((num_outputs,), dtype=jnp.float32)

    # Case 1: default path — only the distribution's eagerly-stored state (normalized logits).
    B = 8
    x = jax.random.normal(kx, (B, num_inputs), dtype=jnp.float32)
    logits = categorical_forward(x, weight, bias)
    jax.block_until_ready(logits)

    raw_ref = x @ weight.T + bias
    logits_ref = raw_ref - jax.scipy.special.logsumexp(raw_ref, axis=-1, keepdims=True)
    assert jnp.allclose(logits, logits_ref, atol=1e-5), "logits mismatch"

    # Case 2: logits + probs, with B not a multiple of the batch tile to exercise the ragged
    # boundary-block path (replaces the old jnp.pad + output-slice wrapper traffic).
    B2 = 20
    x2 = jax.random.normal(kx2, (B2, num_inputs), dtype=jnp.float32)
    logits2, probs2 = categorical_forward(x2, weight, bias, return_probs=True)
    jax.block_until_ready((logits2, probs2))

    raw2 = x2 @ weight.T + bias
    logits2_ref = raw2 - jax.scipy.special.logsumexp(raw2, axis=-1, keepdims=True)
    probs2_ref = jax.nn.softmax(raw2, axis=-1)
    assert jnp.allclose(logits2, logits2_ref, atol=1e-5), "logits (ragged) mismatch"
    assert jnp.allclose(probs2, probs2_ref, atol=1e-5), "probs mismatch"
    assert jnp.allclose(jnp.sum(probs2, axis=-1), 1.0, atol=1e-4), "probs don't sum to 1"

    print("KERNEL_OK")
</pallas_src>

<mosaic_0001>
module attributes {stable_mosaic.version = 11 : i64} {
  func.func @_logits_kernel(%arg0: i32, %arg1: memref<8x32xf32, #tpu.memory_space<vmem>>, %arg2: memref<32x16xf32, #tpu.memory_space<vmem>>, %arg3: memref<1x16xf32, #tpu.memory_space<vmem>>, %arg4: memref<8x16xf32, #tpu.memory_space<vmem>>) attributes {dimension_semantics = [#tpu.dimension_semantics<parallel>], iteration_bounds = array<i64: 1>, scalar_prefetch = 0 : i64, scratch_operands = 0 : i64, tpu.core_type = #tpu.core_type<tc>, window_params = [{transform_indices = @transform_0, window_bounds = array<i64: 8, 32>}, {pipeline_mode = #tpu.pipeline_mode<synchronous>, transform_indices = @transform_1, window_bounds = array<i64: 32, 16>}, {pipeline_mode = #tpu.pipeline_mode<synchronous>, transform_indices = @transform_2, window_bounds = array<i64: 1, 16>}, {transform_indices = @transform_3, window_bounds = array<i64: 8, 16>}]} {
    %c0 = arith.constant 0 : index
    %c0_0 = arith.constant 0 : index
    %0 = vector.load %arg1[%c0, %c0_0] : memref<8x32xf32, #tpu.memory_space<vmem>>, vector<8x32xf32>
    %c0_1 = arith.constant 0 : index
    %c0_2 = arith.constant 0 : index
    %1 = vector.load %arg2[%c0_1, %c0_2] : memref<32x16xf32, #tpu.memory_space<vmem>>, vector<32x16xf32>
    %cst = arith.constant dense<0.000000e+00> : vector<8x16xf32>
    %2 = tpu.matmul %0, %1, %cst {dimension_numbers = #tpu.dot_dimension_numbers<[1], [0], [0], [1], [0, 0, 1, 1], [], []>} : vector<8x32xf32>, vector<32x16xf32>, vector<8x16xf32> -> vector<8x16xf32>
    %c0_3 = arith.constant 0 : index
    %c0_4 = arith.constant 0 : index
    %3 = vector.load %arg3[%c0_3, %c0_4] : memref<1x16xf32, #tpu.memory_space<vmem>>, vector<1x16xf32>
    %4 = vector.broadcast %3 : vector<1x16xf32> to vector<8x16xf32>
    %5 = arith.addf %2, %4 : vector<8x16xf32>
    %cst_5 = arith.constant dense<0xFF800000> : vector<8xf32>
    %6 = vector.multi_reduction <maximumf>, %5, %cst_5 [1] : vector<8x16xf32> to vector<8xf32>
    %7 = vector.shape_cast %6 : vector<8xf32> to vector<8x1xf32>
    %8 = vector.broadcast %7 : vector<8x1xf32> to vector<8x16xf32>
    %9 = arith.subf %5, %8 : vector<8x16xf32>
    %10 = math.exp %9 : vector<8x16xf32>
    %cst_6 = arith.constant dense<0.000000e+00> : vector<8xf32>
    %11 = vector.multi_reduction <add>, %10, %cst_6 [1] : vector<8x16xf32> to vector<8xf32>
    %12 = vector.shape_cast %11 : vector<8xf32> to vector<8x1xf32>
    %13 = math.log %12 : vector<8x1xf32>
    %14 = vector.broadcast %13 : vector<8x1xf32> to vector<8x16xf32>
    %15 = arith.subf %9, %14 : vector<8x16xf32>
    %c0_7 = arith.constant 0 : index
    %c0_8 = arith.constant 0 : index
    %16 = vector.load %arg4[%c0_7, %c0_8] : memref<8x16xf32, #tpu.memory_space<vmem>>, vector<8x16xf32>
    tpu.vector_store %arg4[%c0_7, %c0_8], %15 {strides = array<i32>} : memref<8x16xf32, #tpu.memory_space<vmem>>, vector<8x16xf32>,
    return
  }
  func.func @transform_0(%arg0: i32) -> (i32, i32) {
    %c0_i32 = arith.constant 0 : i32
    %c0_i32_0 = arith.constant 0 : i32
    return %arg0, %c0_i32 : i32, i32
  }
  func.func @transform_1(%arg0: i32) -> (i32, i32) {
    %c0_i32 = arith.constant 0 : i32
    %c0_i32_0 = arith.constant 0 : i32
    %c0_i32_1 = arith.constant 0 : i32
    return %c0_i32, %c0_i32_0 : i32, i32
  }
  func.func @transform_2(%arg0: i32) -> (i32, i32) {
    %c0_i32 = arith.constant 0 : i32
    %c0_i32_0 = arith.constant 0 : i32
    %c0_i32_1 = arith.constant 0 : i32
    return %c0_i32, %c0_i32_0 : i32, i32
  }
  func.func @transform_3(%arg0: i32) -> (i32, i32) {
    %c0_i32 = arith.constant 0 : i32
    %c0_i32_0 = arith.constant 0 : i32
    return %arg0, %c0_i32 : i32, i32
  }
}

</mosaic_0001>

<llo_original>
// kernel: tpu_custom_call.1
$region0: #{tpu_custom_call.1}
  #allocation0 [shape = 'u32[]', space=smem, size = 0x4, offset = 0x4, fixed_abs, tag = 'smem constant byte address 0x4 - core index']
  #allocation1 [shape = 'u32[144,128]{1,0:T(1,128)}', space=vmem, size = 0x12000, scoped, tag = 'internal scratch']
  %s0 = inlined_call_operand.vmem [shape: f32[8,32], index: 0, kind: input, shape index: {}]
  %s1 = inlined_call_operand.vmem [shape: f32[32,16], index: 1, kind: input, shape index: {}]
  %s2 = inlined_call_operand.vmem [shape: f32[1,16], index: 2, kind: input, shape index: {}]
  %s3 = inlined_call_operand.hbm [shape: f32[8,16], index: 3, kind: output, shape index: {}]
  %s4 = sld [smem:[#allocation0]]
  $region22: #{tpu_custom_call.1} parent=0
    _
  %s6 = ssub.s32 1, %s4
  %s7 = scalar_select 0, %s6, %s4
  $region1: #{tpu_custom_call.1} parent=0
    #allocation2 [shape = 'u8[4096]{0}', space=vmem, size = 0x1000, scoped, tag = 'output window, operand 0, single buffered']
    #allocation3 [shape = 's32[1]{0}', space=sflag, size = 0x4, scoped, tag = 'scoped memory for tpu_custom_call.1']
    %8 = vsyncpa [#allocation3], 0
    // Predicated region
    $region2: #{tpu_custom_call.1} parent=1 // pred_check
      _
    $region3: #{tpu_custom_call.1} parent=1 // pred_check_branch
      %10 = sbr.rel (0) target = $region5
    $region4: #{tpu_custom_call.1} parent=1 // pred_region
      _
    $region5: #{tpu_custom_call.1} parent=1 // pred_fallthru
      _
    // Predicated region
    $region6: #{tpu_custom_call.1} parent=1 // pred_check
      _
    $region7: #{tpu_custom_call.1} parent=1 // pred_check_branch
      %12 = sbr.rel (0) target = $region9
    $region8: #{tpu_custom_call.1} parent=1 // pred_region
      _
    $region9: #{tpu_custom_call.1} parent=1 // pred_fallthru
      _
    // Predicated region
    $region10: #{tpu_custom_call.1} parent=1 // pred_check
      _
    $region11: #{tpu_custom_call.1} parent=1 // pred_check_branch
      %14 = sbr.rel (0) target = $region13
    $region12: #{tpu_custom_call.1} parent=1 // pred_region
      _
    $region13: #{tpu_custom_call.1} parent=1 // pred_fallthru
      _
    %v15 = vld [vmem:[%s0] sm:$0xff]
    %v16 = vld [vmem:[%s1] sm:$0xff]
    %v17 = vld [vmem:[%s1 + $0x8] sm:$0xff]
    %v18 = vld [vmem:[%s1 + $0x10] sm:$0xff]
    %v19 = vld [vmem:[%s1 + $0x18] sm:$0xff]
    %v20 = vld [vmem:[%s2] sm:$0x1]
    %v22 = vlaneseq
    %v23 = vshrl.u32 %v22, 7
    %v24 = vsub.s32 0, %v23
    %v25 = vrot.slane %v20, %v24
    %vm27 = vcmask 261120
    %v29 = vsel %vm27, %v15, 0
    %31 = vmatprep.subr.mxu0 0.0
    %32 = vmatpush1.msra.mxu0 %v16
    %33 = vmatprep.subr.mxu0 0.0
    %34 = vmatpush1.msra.mxu0 %v17
    %35 = vmatprep.subr.mxu0 0.0
    %36 = vmatpush1.msra.mxu0 %v18
    %37 = vmatprep.subr.mxu0 0.0
    %38 = vmatpush1.msra.mxu0 %v19
    %39 = vmatprep.subr.mxu0 0.0
    %40 = vmatpush1.msra.mxu0 0.0
    %41 = vmatprep.subr.mxu0 0.0
    %42 = vmatpush1.msra.mxu0 0.0
    %43 = vmatprep.subr.mxu0 0.0
    %44 = vmatpush1.msra.mxu0 0.0
    %45 = vmatprep.subr.mxu0 0.0
    %46 = vmatpush1.msra.mxu0 0.0
    %47 = vmatprep.subr.mxu0 0.0
    %48 = vmatpush1.msra.mxu0 0.0
    %49 = vmatprep.subr.mxu0 0.0
    %50 = vmatpush1.msra.mxu0 0.0
    %51 = vmatprep.subr.mxu0 0.0
    %52 = vmatpush1.msra.mxu0 0.0
    %53 = vmatprep.subr.mxu0 0.0
    %54 = vmatpush1.msra.mxu0 0.0
    %55 = vmatprep.subr.mxu0 0.0
    %56 = vmatpush1.msra.mxu0 0.0
    %57 = vmatprep.subr.mxu0 0.0
    %58 = vmatpush1.msra.mxu0 0.0
    %59 = vmatprep.subr.mxu0 0.0
    %60 = vmatpush1.msra.mxu0 0.0
    %61 = vmatprep.subr.mxu0 0.0
    %62 = vmatpush1.msra.mxu0 0.0
    %63 = vmatprep.subr.mxu0 0.0
    %64 = vmatpush1.msra.mxu0 0.0
    %65 = vmatprep.subr.mxu0 0.0
    %66 = vmatpush1.msra.mxu0 0.0
    %67 = vmatprep.subr.mxu0 0.0
    %68 = vmatpush1.msra.mxu0 0.0
    %69 = vmatprep.subr.mxu0 0.0
    %70 = vmatpush1.msra.mxu0 0.0
    %71 = vmatprep.subr.mxu0 0.0
    %72 = vmatpush1.msra.mxu0 0.0
    %73 = vmatprep.subr.mxu0 0.0
    %74 = vmatpush1.msra.mxu0 0.0
    %75 = vmatprep.subr.mxu0 0.0
    %76 = vmatpush1.msra.mxu0 0.0
    %77 = vmatprep.subr.mxu0 0.0
    %78 = vmatpush1.msra.mxu0 0.0
    %79 = vmatprep.subr.mxu0 0.0
    %80 = vmatpush1.msra.mxu0 0.0
    %81 = vmatprep.subr.mxu0 0.0
    %82 = vmatpush1.msra.mxu0 0.0
    %83 = vmatprep.subr.mxu0 0.0
    %84 = vmatpush1.msra.mxu0 0.0
    %85 = vmatprep.subr.mxu0 0.0
    %86 = vmatpush1.msra.mxu0 0.0
    %87 = vmatprep.subr.mxu0 0.0
    %88 = vmatpush1.msra.mxu0 0.0
    %89 = vmatprep.subr.mxu0 0.0
    %90 = vmatpush1.msra.mxu0 0.0
    %91 = vmatprep.subr.mxu0 0.0
    %92 = vmatpush1.msra.mxu0 0.0
    %93 = vmatprep.subr.mxu0 0.0
    %94 = vmatpush1.msra.mxu0 0.0
    %95 = vmatprep.mubr.f32.mxu0 0.0
    %96 = vmatmul.mubr.f32.gmra.mrb[0].mxu0 %v29
    %v97 = vpop.f32.mrb[0].mxu0
    %v98 = vadd.f32 %v25, %v97
    %v99 = vpop.f32.mrb[0].mxu0
    %100 = vdwg.mxu0
    %vm101 = vcmask 130048
    %v102 = vsel %vm101, %v98, -inf
    %103 = vmax.xlane.f32.xlu0 %v102
    %v104 = vpop.xlane.xlu0 %103
    %v105 = vsub.f32 %v98, %v104
    %v106 = vmul.f32 %v105, 1.442695
    %v107 = vpow.pop %v106
    %v108 = vsel %vm101, %v107, 0.0
    %109 = vadd.xlane.f32.xlu0 %v108
    %v110 = vpop.xlane.xlu0 %109
    %v111 = vlog2.pop %v110
    %v112 = vmul.f32 %v111, 0.6931472
    %v113 = vsub.f32 %v105, %v112
    %114 = vst.msk [vmem:[#allocation2] sm:$0xff] %vm101, %v113
    // Predicated region
    $region14: #{tpu_custom_call.1} parent=1 // pred_check
      _
    $region15: #{tpu_custom_call.1} parent=1 // pred_check_branch
      %116 = sbr.rel (0) target = $region17
    $region16: #{tpu_custom_call.1} parent=1 // pred_region
      %s118 = ssub.s32 128, 128
      %119 = vsyncadd [#allocation3], %s118
      %s121 = sshll.u32 [#allocation2], 4
      %s122 = int_to_ptr.vmem [resolvable:$true] %s121
      %124 = dma.vmem_to_hbm [thread:$0]  %s122, 128, %s3, [#allocation3]
    $region17: #{tpu_custom_call.1} parent=1 // pred_fallthru
      _
    // Predicated region
    $region18: #{tpu_custom_call.1} parent=1 // pred_check
      _
    $region19: #{tpu_custom_call.1} parent=1 // pred_check_branch
      %126 = sbr.rel (0) target = $region21
    $region20: #{tpu_custom_call.1} parent=1 // pred_region
      %127 = dma.done [#allocation3], 128
    $region21: #{tpu_custom_call.1} parent=1 // pred_fallthru
      _
    %128 = vsyncpa [#allocation3], 1

</llo_original>
